<compile_context>
chip_gen: v6e
topology: v6e:2x2x1
jax: 0.10.0
libtpu: 0.0.40
codegen_flags: <defaults>
</compile_context>

<pallas_src>
import functools

import jax
import jax.numpy as jnp
from jax import lax
from jax.experimental import pallas as pl
from jax.experimental.pallas import tpu as pltpu


def _round_up(x, m):
    return ((x + m - 1) // m) * m


# --------------------------------------------------------------------------
# Kernel 1: fused 1x1x1 convs (= one matmul over channels) + folded-BN + ReLU
# --------------------------------------------------------------------------
def _pw_kernel(x_ref, w_ref, s_ref, b_ref, o_ref):
    acc = jnp.dot(x_ref[...], w_ref[...], preferred_element_type=jnp.float32)
    o_ref[...] = jnp.maximum(acc * s_ref[...] + b_ref[...], 0.0).astype(o_ref.dtype)


def pointwise_conv_bn_relu(x_flat, w, scale, bias, *, tm=512):
    """x_flat: (M, Cin); w: (Cin, Cout); scale/bias: (Cout,) -> (M, Cout)."""
    M, Cin = x_flat.shape
    Cout = w.shape[1]
    tm = min(tm, _round_up(M, 8))
    Mp = _round_up(M, tm)
    if Mp != M:
        x_flat = jnp.pad(x_flat, ((0, Mp - M), (0, 0)))
    s = scale.reshape(1, Cout).astype(jnp.float32)
    b = bias.reshape(1, Cout).astype(jnp.float32)
    out = pl.pallas_call(
        _pw_kernel,
        out_shape=jax.ShapeDtypeStruct((Mp, Cout), x_flat.dtype),
        grid_spec=pltpu.PrefetchScalarGridSpec(
            num_scalar_prefetch=0,
            grid=(Mp // tm,),
            in_specs=[
                pl.BlockSpec((tm, Cin), lambda i: (i, 0)),
                pl.BlockSpec((Cin, Cout), lambda i: (0, 0)),
                pl.BlockSpec((1, Cout), lambda i: (0, 0)),
                pl.BlockSpec((1, Cout), lambda i: (0, 0)),
            ],
            out_specs=pl.BlockSpec((tm, Cout), lambda i: (i, 0)),
        ),
        compiler_params=pltpu.CompilerParams(dimension_semantics=("parallel",)),
    )(x_flat, w.astype(x_flat.dtype), s, b)
    return out[:M] if Mp != M else out


# --------------------------------------------------------------------------
# Kernel 2: fused dual 3x3x3 conv (branch_1 + branch_2), SAME pad, stride 1,
#           folded-BN + ReLU.  Grid = (N, T); the T halo is supplied via three
#           overlapping T-slice BlockSpecs; 3x3 taps are folded into K.
# --------------------------------------------------------------------------
def _dual_conv3_kernel(xa0, xa1, xa2, xb0, xb1, xb2,
                       wa_ref, wb_ref, sa_ref, ba_ref, sb_ref, bb_ref,
                       o_ref, *, fold_taps):
    Hp, Wp = xa0.shape[2], xa0.shape[3]
    H, W = Hp - 2, Wp - 2
    Coa = wa_ref.shape[-1]
    Cob = wb_ref.shape[-1]

    def branch(slices, w_ref, cin, cout):
        acc = jnp.zeros((H * W, cout), jnp.float32)
        for kd in range(3):
            x = slices[kd][...].reshape(Hp, Wp, cin)
            if fold_taps:
                # Fold the 3x3 spatial taps into the contraction dim: K = 9*cin.
                patch = jnp.concatenate(
                    [x[kh:kh + H, kw:kw + W, :]
                     for kh in range(3) for kw in range(3)],
                    axis=-1).reshape(H * W, 9 * cin)
                acc = acc + jnp.dot(patch, w_ref[kd],
                                    preferred_element_type=jnp.float32)
            else:
                wk = w_ref[kd]  # (9*cin, cout)
                for t in range(9):
                    kh, kw = divmod(t, 3)
                    p = x[kh:kh + H, kw:kw + W, :].reshape(H * W, cin)
                    acc = acc + jnp.dot(p, wk[t * cin:(t + 1) * cin, :],
                                        preferred_element_type=jnp.float32)
        return acc

    acc_a = branch((xa0, xa1, xa2), wa_ref, xa0.shape[4], Coa)
    acc_b = branch((xb0, xb1, xb2), wb_ref, xb0.shape[4], Cob)
    out_a = jnp.maximum(acc_a * sa_ref[...] + ba_ref[...], 0.0)
    out_b = jnp.maximum(acc_b * sb_ref[...] + bb_ref[...], 0.0)
    o_ref[0, 0, :, :, :Coa] = out_a.reshape(H, W, Coa).astype(o_ref.dtype)
    o_ref[0, 0, :, :, Coa:] = out_b.reshape(H, W, Cob).astype(o_ref.dtype)


def dual_conv3x3x3_bn_relu(xa, wa, sa, ba, xb, wb, sb, bb):
    """xa: (N,T,H,W,Ca), wa: (3,3,3,Ca,Coa); same for the *b branch.
    Returns the channel concat [conv3(xa) | conv3(xb)]: (N,T,H,W,Coa+Cob)."""
    N, T, H, W, Ca = xa.shape
    Cb = xb.shape[-1]
    Coa, Cob = wa.shape[-1], wb.shape[-1]
    Cout = Coa + Cob
    Hp, Wp = H + 2, W + 2

    xap = jnp.pad(xa, ((0, 0), (1, 1), (1, 1), (1, 1), (0, 0)))
    xbp = jnp.pad(xb, ((0, 0), (1, 1), (1, 1), (1, 1), (0, 0)))
    wa9 = wa.reshape(3, 9 * Ca, Coa).astype(xa.dtype)
    wb9 = wb.reshape(3, 9 * Cb, Cob).astype(xb.dtype)
    sa2 = sa.reshape(1, Coa).astype(jnp.float32)
    ba2 = ba.reshape(1, Coa).astype(jnp.float32)
    sb2 = sb.reshape(1, Cob).astype(jnp.float32)
    bb2 = bb.reshape(1, Cob).astype(jnp.float32)

    def xa_spec(off):
        return pl.BlockSpec((1, 1, Hp, Wp, Ca),
                            lambda n, t, off=off: (n, t + off, 0, 0, 0))

    def xb_spec(off):
        return pl.BlockSpec((1, 1, Hp, Wp, Cb),
                            lambda n, t, off=off: (n, t + off, 0, 0, 0))

    def build(fold_taps):
        return pl.pallas_call(
            functools.partial(_dual_conv3_kernel, fold_taps=fold_taps),
            out_shape=jax.ShapeDtypeStruct((N, T, H, W, Cout), xa.dtype),
            grid_spec=pltpu.PrefetchScalarGridSpec(
                num_scalar_prefetch=0,
                grid=(N, T),
                in_specs=[
                    xa_spec(0), xa_spec(1), xa_spec(2),
                    xb_spec(0), xb_spec(1), xb_spec(2),
                    pl.BlockSpec((3, 9 * Ca, Coa), lambda n, t: (0, 0, 0)),
                    pl.BlockSpec((3, 9 * Cb, Cob), lambda n, t: (0, 0, 0)),
                    pl.BlockSpec((1, Coa), lambda n, t: (0, 0)),
                    pl.BlockSpec((1, Coa), lambda n, t: (0, 0)),
                    pl.BlockSpec((1, Cob), lambda n, t: (0, 0)),
                    pl.BlockSpec((1, Cob), lambda n, t: (0, 0)),
                ],
                out_specs=pl.BlockSpec((1, 1, H, W, Cout),
                                       lambda n, t: (n, t, 0, 0, 0)),
            ),
            compiler_params=pltpu.CompilerParams(
                dimension_semantics=("parallel", "parallel")),
        )

    args = (xap, xap, xap, xbp, xbp, xbp, wa9, wb9, sa2, ba2, sb2, bb2)
    try:
        return build(True)(*args)
    except Exception:
        # Fallback: per-tap K=Cin dots (for Mosaic builds without unaligned
        # lane-concat support). Numerically identical.
        return build(False)(*args)


# --------------------------------------------------------------------------
# Kernel 3: MaxPool3d 3x3x3, stride 1, TF-SAME (zero pad, like ConstantPad3d)
#           fused with the following 1x1x1 conv + folded-BN + ReLU.
#           Grid = (N, T), separable running max (T, then W, then H).
# --------------------------------------------------------------------------
def _pool_pw_kernel(x0_ref, x1_ref, x2_ref, w_ref, s_ref, b_ref, o_ref):
    Hp, Wp, C = x0_ref.shape[2], x0_ref.shape[3], x0_ref.shape[4]
    H, W = Hp - 2, Wp - 2
    Cout = w_ref.shape[-1]
    mt = jnp.maximum(jnp.maximum(x0_ref[...], x1_ref[...]),
                     x2_ref[...]).reshape(Hp, Wp, C)
    mw = jnp.maximum(jnp.maximum(mt[:, 0:W, :], mt[:, 1:W + 1, :]),
                     mt[:, 2:W + 2, :])                     # (Hp, W, C)
    mh = jnp.maximum(jnp.maximum(mw[0:H], mw[1:H + 1]), mw[2:H + 2])  # (H, W, C)
    p = mh.reshape(H * W, C)
    acc = jnp.dot(p, w_ref[...], preferred_element_type=jnp.float32)
    out = jnp.maximum(acc * s_ref[...] + b_ref[...], 0.0)
    o_ref[...] = out.reshape(1, 1, H, W, Cout).astype(o_ref.dtype)


def maxpool3_pointwise_bn_relu(x, w, scale, bias):
    """x: (N,T,H,W,Cin) NDHWC; w: (Cin,Cout). Zero-pad + 3x3x3 maxpool + 1x1x1."""
    N, T, H, W, Cin = x.shape
    Cout = w.shape[-1]
    Hp, Wp = H + 2, W + 2
    xp = jnp.pad(x, ((0, 0), (1, 1), (1, 1), (1, 1), (0, 0)))  # ConstantPad3d(0)
    s = scale.reshape(1, Cout).astype(jnp.float32)
    b = bias.reshape(1, Cout).astype(jnp.float32)

    def x_spec(off):
        return pl.BlockSpec((1, 1, Hp, Wp, Cin),
                            lambda n, t, off=off: (n, t + off, 0, 0, 0))

    return pl.pallas_call(
        _pool_pw_kernel,
        out_shape=jax.ShapeDtypeStruct((N, T, H, W, Cout), x.dtype),
        grid_spec=pltpu.PrefetchScalarGridSpec(
            num_scalar_prefetch=0,
            grid=(N, T),
            in_specs=[
                x_spec(0), x_spec(1), x_spec(2),
                pl.BlockSpec((Cin, Cout), lambda n, t: (0, 0)),
                pl.BlockSpec((1, Cout), lambda n, t: (0, 0)),
                pl.BlockSpec((1, Cout), lambda n, t: (0, 0)),
            ],
            out_specs=pl.BlockSpec((1, 1, H, W, Cout),
                                   lambda n, t: (n, t, 0, 0, 0)),
        ),
        compiler_params=pltpu.CompilerParams(
            dimension_semantics=("parallel", "parallel")),
    )(xp, xp, xp, w.astype(x.dtype), s, b)


# --------------------------------------------------------------------------
# Parameter construction (deterministic, synthetic) and Mixed forward
# --------------------------------------------------------------------------
_BN_EPS = 1e-5


def _init_unit3d(key, cin, cout, ksize):
    kw, kg, kb, km, kv = jax.random.split(key, 5)
    if ksize == 1:
        w = 0.1 * jax.random.normal(kw, (cin, cout), jnp.float32)
    else:
        w = 0.05 * jax.random.normal(kw, (3, 3, 3, cin, cout), jnp.float32)
    gamma = 1.0 + 0.1 * jax.random.normal(kg, (cout,), jnp.float32)
    beta = 0.1 * jax.random.normal(kb, (cout,), jnp.float32)
    run_mean = 0.05 * jax.random.normal(km, (cout,), jnp.float32)
    run_var = 0.5 + jax.random.uniform(kv, (cout,), jnp.float32)
    scale = gamma / jnp.sqrt(run_var + _BN_EPS)
    bias = beta - run_mean * scale
    return w, scale, bias


def init_mixed_params(key, in_channels, out_channels):
    keys = jax.random.split(key, 6)
    return {
        "b0":   _init_unit3d(keys[0], in_channels,     out_channels[0], 1),
        "b1_1": _init_unit3d(keys[1], in_channels,     out_channels[1], 1),
        "b1_2": _init_unit3d(keys[2], out_channels[1], out_channels[2], 3),
        "b2_1": _init_unit3d(keys[3], in_channels,     out_channels[3], 1),
        "b2_2": _init_unit3d(keys[4], out_channels[3], out_channels[4], 3),
        "b3":   _init_unit3d(keys[5], in_channels,     out_channels[5], 1),
    }


def mixed_forward(x_ncdhw, params):
    """Pallas forward of Mixed.  Input/output are NCDHW like the torch module."""
    x = jnp.transpose(x_ncdhw, (0, 2, 3, 4, 1))  # -> NDHWC
    N, T, H, W, Cin = x.shape
    x_flat = x.reshape(N * T * H * W, Cin)

    # Fused input-side 1x1x1 convs: [branch0 | branch1.conv1 | branch2.conv1]
    w0, s0, b0 = params["b0"]
    w11, s11, b11 = params["b1_1"]
    w21, s21, b21 = params["b2_1"]
    c0, c1b, c2b = w0.shape[1], w11.shape[1], w21.shape[1]
    w_cat = jnp.concatenate([w0, w11, w21], axis=1)
    s_cat = jnp.concatenate([s0, s11, s21])
    b_cat = jnp.concatenate([b0, b11, b21])
    pw = pointwise_conv_bn_relu(x_flat, w_cat, s_cat, b_cat)
    pw = pw.reshape(N, T, H, W, c0 + c1b + c2b)
    out0 = pw[..., :c0]
    t1 = pw[..., c0:c0 + c1b]
    t2 = pw[..., c0 + c1b:]

    # Fused dual 3x3x3 conv: [branch1 | branch2]
    w12, s12, b12 = params["b1_2"]
    w22, s22, b22 = params["b2_2"]
    out12 = dual_conv3x3x3_bn_relu(t1, w12, s12, b12, t2, w22, s22, b22)

    # branch 3: maxpool(3,3,3)/s1 SAME -> 1x1x1
    w3, s3, b3 = params["b3"]
    out3 = maxpool3_pointwise_bn_relu(x, w3, s3, b3)

    out = jnp.concatenate([out0, out12, out3], axis=-1)  # channel concat
    return jnp.transpose(out, (0, 4, 1, 2, 3))  # -> NCDHW


# --------------------------------------------------------------------------
# Pure-JAX reference (lax convs / reduce_window) for correctness check
# --------------------------------------------------------------------------
def _ref_pw(x, w, s, b):
    y = lax.conv_general_dilated(
        x, w.reshape(1, 1, 1, *w.shape), (1, 1, 1), "VALID",
        dimension_numbers=("NDHWC", "DHWIO", "NDHWC"))
    return jnp.maximum(y * s + b, 0.0)


def _ref_c3(x, w, s, b):
    y = lax.conv_general_dilated(
        x, w, (1, 1, 1), ((1, 1), (1, 1), (1, 1)),
        dimension_numbers=("NDHWC", "DHWIO", "NDHWC"))
    return jnp.maximum(y * s + b, 0.0)


def _ref_pool(x):
    xp = jnp.pad(x, ((0, 0), (1, 1), (1, 1), (1, 1), (0, 0)))
    return lax.reduce_window(xp, -jnp.inf, lax.max,
                             (1, 3, 3, 3, 1), (1, 1, 1, 1, 1), "VALID")


def mixed_reference(x_ncdhw, params):
    x = jnp.transpose(x_ncdhw, (0, 2, 3, 4, 1))
    w, s, b = params["b0"]; out0 = _ref_pw(x, w, s, b)
    w, s, b = params["b1_1"]; t1 = _ref_pw(x, w, s, b)
    w, s, b = params["b1_2"]; out1 = _ref_c3(t1, w, s, b)
    w, s, b = params["b2_1"]; t2 = _ref_pw(x, w, s, b)
    w, s, b = params["b2_2"]; out2 = _ref_c3(t2, w, s, b)
    w, s, b = params["b3"];  out3 = _ref_pw(_ref_pool(x), w, s, b)
    out = jnp.concatenate([out0, out1, out2, out3], axis=-1)
    return jnp.transpose(out, (0, 4, 1, 2, 3))


# --------------------------------------------------------------------------
if __name__ == "__main__":
    key = jax.random.PRNGKey(0)
    k_x, k_p = jax.random.split(key)

    # Small I3D-style shapes: N=2, Cin=16, T=4, H=W=8 (NCDHW, like torch).
    N, Cin, T, H, W = 2, 16, 4, 8, 8
    out_channels = (8, 8, 16, 4, 8, 8)  # -> concat channels = 8+16+8+8 = 40

    x = jax.random.normal(k_x, (N, Cin, T, H, W), jnp.float32)
    params = init_mixed_params(k_p, Cin, out_channels)

    out = jax.block_until_ready(mixed_forward(x, params))

    expected_c = out_channels[0] + out_channels[2] + out_channels[4] + out_channels[5]
    assert out.shape == (N, expected_c, T, H, W), out.shape

    ref = jax.block_until_ready(mixed_reference(x, params))
    err = float(jnp.max(jnp.abs(out - ref)))
    assert jnp.allclose(out, ref, rtol=1e-3, atol=1e-3), err

    print("KERNEL_OK")
</pallas_src>

<mosaic_0001>
module attributes {stable_mosaic.version = 11 : i64} {
  func.func @_pw_kernel(%arg0: i32, %arg1: memref<512x16xf32, #tpu.memory_space<vmem>>, %arg2: memref<16x20xf32, #tpu.memory_space<vmem>>, %arg3: memref<1x20xf32, #tpu.memory_space<vmem>>, %arg4: memref<1x20xf32, #tpu.memory_space<vmem>>, %arg5: memref<512x20xf32, #tpu.memory_space<vmem>>) attributes {dimension_semantics = [#tpu.dimension_semantics<parallel>], iteration_bounds = array<i64: 1>, scalar_prefetch = 0 : i64, scratch_operands = 0 : i64, tpu.core_type = #tpu.core_type<tc>, window_params = [{transform_indices = @transform_0, window_bounds = array<i64: 512, 16>}, {pipeline_mode = #tpu.pipeline_mode<synchronous>, transform_indices = @transform_1, window_bounds = array<i64: 16, 20>}, {pipeline_mode = #tpu.pipeline_mode<synchronous>, transform_indices = @transform_2, window_bounds = array<i64: 1, 20>}, {pipeline_mode = #tpu.pipeline_mode<synchronous>, transform_indices = @transform_3, window_bounds = array<i64: 1, 20>}, {transform_indices = @transform_4, window_bounds = array<i64: 512, 20>}]} {
    %c0 = arith.constant 0 : index
    %c0_0 = arith.constant 0 : index
    %0 = vector.load %arg1[%c0, %c0_0] : memref<512x16xf32, #tpu.memory_space<vmem>>, vector<512x16xf32>
    %c0_1 = arith.constant 0 : index
    %c0_2 = arith.constant 0 : index
    %1 = vector.load %arg2[%c0_1, %c0_2] : memref<16x20xf32, #tpu.memory_space<vmem>>, vector<16x20xf32>
    %cst = arith.constant dense<0.000000e+00> : vector<512x20xf32>
    %2 = tpu.matmul %0, %1, %cst {dimension_numbers = #tpu.dot_dimension_numbers<[1], [0], [0], [1], [0, 0, 1, 1], [], []>} : vector<512x16xf32>, vector<16x20xf32>, vector<512x20xf32> -> vector<512x20xf32>
    %c0_3 = arith.constant 0 : index
    %c0_4 = arith.constant 0 : index
    %3 = vector.load %arg3[%c0_3, %c0_4] : memref<1x20xf32, #tpu.memory_space<vmem>>, vector<1x20xf32>
    %4 = vector.broadcast %3 : vector<1x20xf32> to vector<512x20xf32>
    %5 = arith.mulf %2, %4 : vector<512x20xf32>
    %c0_5 = arith.constant 0 : index
    %c0_6 = arith.constant 0 : index
    %6 = vector.load %arg4[%c0_5, %c0_6] : memref<1x20xf32, #tpu.memory_space<vmem>>, vector<1x20xf32>
    %7 = vector.broadcast %6 : vector<1x20xf32> to vector<512x20xf32>
    %8 = arith.addf %5, %7 : vector<512x20xf32>
    %cst_7 = arith.constant 0.000000e+00 : f32
    %9 = vector.broadcast %cst_7 : f32 to vector<512x20xf32>
    %10 = arith.maximumf %8, %9 : vector<512x20xf32>
    %c0_8 = arith.constant 0 : index
    %c0_9 = arith.constant 0 : index
    %11 = vector.load %arg5[%c0_8, %c0_9] : memref<512x20xf32, #tpu.memory_space<vmem>>, vector<512x20xf32>
    tpu.vector_store %arg5[%c0_8, %c0_9], %10 {strides = array<i32>} : memref<512x20xf32, #tpu.memory_space<vmem>>, vector<512x20xf32>,
    return
  }
  func.func @transform_0(%arg0: i32) -> (i32, i32) {
    %c0_i32 = arith.constant 0 : i32
    %c0_i32_0 = arith.constant 0 : i32
    return %arg0, %c0_i32 : i32, i32
  }
  func.func @transform_1(%arg0: i32) -> (i32, i32) {
    %c0_i32 = arith.constant 0 : i32
    %c0_i32_0 = arith.constant 0 : i32
    %c0_i32_1 = arith.constant 0 : i32
    return %c0_i32, %c0_i32_0 : i32, i32
  }
  func.func @transform_2(%arg0: i32) -> (i32, i32) {
    %c0_i32 = arith.constant 0 : i32
    %c0_i32_0 = arith.constant 0 : i32
    %c0_i32_1 = arith.constant 0 : i32
    return %c0_i32, %c0_i32_0 : i32, i32
  }
  func.func @transform_3(%arg0: i32) -> (i32, i32) {
    %c0_i32 = arith.constant 0 : i32
    %c0_i32_0 = arith.constant 0 : i32
    %c0_i32_1 = arith.constant 0 : i32
    return %c0_i32, %c0_i32_0 : i32, i32
  }
  func.func @transform_4(%arg0: i32) -> (i32, i32) {
    %c0_i32 = arith.constant 0 : i32
    %c0_i32_0 = arith.constant 0 : i32
    return %arg0, %c0_i32 : i32, i32
  }
}

</mosaic_0001>

<llo_original>
// kernel: tpu_custom_call.1
$region0: #{tpu_custom_call.1}
  #allocation0 [shape = 'u32[]', space=smem, size = 0x4, offset = 0x4, fixed_abs, tag = 'smem constant byte address 0x4 - core index']
  #allocation1 [shape = 'u32[144,128]{1,0:T(1,128)}', space=vmem, size = 0x12000, scoped, tag = 'internal scratch']
  %s0 = inlined_call_operand.vmem [shape: f32[512,16], index: 0, kind: input, shape index: {}]
  %s1 = inlined_call_operand.vmem [shape: f32[16,20], index: 1, kind: input, shape index: {}]
  %s2 = inlined_call_operand.vmem [shape: f32[1,20], index: 2, kind: input, shape index: {}]
  %s3 = inlined_call_operand.vmem [shape: f32[1,20], index: 3, kind: input, shape index: {}]
  %s4 = inlined_call_operand.vmem [shape: f32[512,20], index: 4, kind: output, shape index: {}]
  %s5 = sld [smem:[#allocation0]]
  $region26: #{tpu_custom_call.1} parent=0
    _
  %s7 = ssub.s32 1, %s5
  %s8 = scalar_select 0, %s7, %s5
  // Predicated region
  $region2: #{tpu_custom_call.1} parent=0 // pred_check
    _
  $region3: #{tpu_custom_call.1} parent=0 // pred_check_branch
    %10 = sbr.rel (0) target = $region5
  $region4: #{tpu_custom_call.1} parent=0 // pred_region
    _
  $region5: #{tpu_custom_call.1} parent=0 // pred_fallthru
    _
  // Predicated region
  $region6: #{tpu_custom_call.1} parent=0 // pred_check
    _
  $region7: #{tpu_custom_call.1} parent=0 // pred_check_branch
    %12 = sbr.rel (0) target = $region9
  $region8: #{tpu_custom_call.1} parent=0 // pred_region
    _
  $region9: #{tpu_custom_call.1} parent=0 // pred_fallthru
    _
  // Predicated region
  $region10: #{tpu_custom_call.1} parent=0 // pred_check
    _
  $region11: #{tpu_custom_call.1} parent=0 // pred_check_branch
    %14 = sbr.rel (0) target = $region13
  $region12: #{tpu_custom_call.1} parent=0 // pred_region
    _
  $region13: #{tpu_custom_call.1} parent=0 // pred_fallthru
    _
  // Predicated region
  $region14: #{tpu_custom_call.1} parent=0 // pred_check
    _
  $region15: #{tpu_custom_call.1} parent=0 // pred_check_branch
    %16 = sbr.rel (0) target = $region17
  $region16: #{tpu_custom_call.1} parent=0 // pred_region
    _
  $region17: #{tpu_custom_call.1} parent=0 // pred_fallthru
    _
  %v17 = vld [vmem:[%s0] sm:$0xff]
  %v18 = vld [vmem:[%s0 + $0x8] sm:$0xff]
  %v19 = vld [vmem:[%s0 + $0x10] sm:$0xff]
  %v20 = vld [vmem:[%s0 + $0x18] sm:$0xff]
  %v21 = vld [vmem:[%s0 + $0x20] sm:$0xff]
  %v22 = vld [vmem:[%s0 + $0x28] sm:$0xff]
  %v23 = vld [vmem:[%s0 + $0x30] sm:$0xff]
  %v24 = vld [vmem:[%s0 + $0x38] sm:$0xff]
  %v25 = vld [vmem:[%s0 + $0x40] sm:$0xff]
  %v26 = vld [vmem:[%s0 + $0x48] sm:$0xff]
  %v27 = vld [vmem:[%s0 + $0x50] sm:$0xff]
  %v28 = vld [vmem:[%s0 + $0x58] sm:$0xff]
  %v29 = vld [vmem:[%s0 + $0x60] sm:$0xff]
  %v30 = vld [vmem:[%s0 + $0x68] sm:$0xff]
  %v31 = vld [vmem:[%s0 + $0x70] sm:$0xff]
  %v32 = vld [vmem:[%s0 + $0x78] sm:$0xff]
  %v33 = vld [vmem:[%s0 + $0x80] sm:$0xff]
  %v34 = vld [vmem:[%s0 + $0x88] sm:$0xff]
  %v35 = vld [vmem:[%s0 + $0x90] sm:$0xff]
  %v36 = vld [vmem:[%s0 + $0x98] sm:$0xff]
  %v37 = vld [vmem:[%s0 + $0xa0] sm:$0xff]
  %v38 = vld [vmem:[%s0 + $0xa8] sm:$0xff]
  %v39 = vld [vmem:[%s0 + $0xb0] sm:$0xff]
  %v40 = vld [vmem:[%s0 + $0xb8] sm:$0xff]
  %v41 = vld [vmem:[%s0 + $0xc0] sm:$0xff]
  %v42 = vld [vmem:[%s0 + $0xc8] sm:$0xff]
  %v43 = vld [vmem:[%s0 + $0xd0] sm:$0xff]
  %v44 = vld [vmem:[%s0 + $0xd8] sm:$0xff]
  %v45 = vld [vmem:[%s0 + $0xe0] sm:$0xff]
  %v46 = vld [vmem:[%s0 + $0xe8] sm:$0xff]
  %v47 = vld [vmem:[%s0 + $0xf0] sm:$0xff]
  %v48 = vld [vmem:[%s0 + $0xf8] sm:$0xff]
  %v49 = vld [vmem:[%s0 + $0x100] sm:$0xff]
  %v50 = vld [vmem:[%s0 + $0x108] sm:$0xff]
  %v51 = vld [vmem:[%s0 + $0x110] sm:$0xff]
  %v52 = vld [vmem:[%s0 + $0x118] sm:$0xff]
  %v53 = vld [vmem:[%s0 + $0x120] sm:$0xff]
  %v54 = vld [vmem:[%s0 + $0x128] sm:$0xff]
  %v55 = vld [vmem:[%s0 + $0x130] sm:$0xff]
  %v56 = vld [vmem:[%s0 + $0x138] sm:$0xff]
  %v57 = vld [vmem:[%s0 + $0x140] sm:$0xff]
  %v58 = vld [vmem:[%s0 + $0x148] sm:$0xff]
  %v59 = vld [vmem:[%s0 + $0x150] sm:$0xff]
  %v60 = vld [vmem:[%s0 + $0x158] sm:$0xff]
  %v61 = vld [vmem:[%s0 + $0x160] sm:$0xff]
  %v62 = vld [vmem:[%s0 + $0x168] sm:$0xff]
  %v63 = vld [vmem:[%s0 + $0x170] sm:$0xff]
  %v64 = vld [vmem:[%s0 + $0x178] sm:$0xff]
  %v65 = vld [vmem:[%s0 + $0x180] sm:$0xff]
  %v66 = vld [vmem:[%s0 + $0x188] sm:$0xff]
  %v67 = vld [vmem:[%s0 + $0x190] sm:$0xff]
  %v68 = vld [vmem:[%s0 + $0x198] sm:$0xff]
  %v69 = vld [vmem:[%s0 + $0x1a0] sm:$0xff]
  %v70 = vld [vmem:[%s0 + $0x1a8] sm:$0xff]
  %v71 = vld [vmem:[%s0 + $0x1b0] sm:$0xff]
  %v72 = vld [vmem:[%s0 + $0x1b8] sm:$0xff]
  %v73 = vld [vmem:[%s0 + $0x1c0] sm:$0xff]
  %v74 = vld [vmem:[%s0 + $0x1c8] sm:$0xff]
  %v75 = vld [vmem:[%s0 + $0x1d0] sm:$0xff]
  %v76 = vld [vmem:[%s0 + $0x1d8] sm:$0xff]
  %v77 = vld [vmem:[%s0 + $0x1e0] sm:$0xff]
  %v78 = vld [vmem:[%s0 + $0x1e8] sm:$0xff]
  %v79 = vld [vmem:[%s0 + $0x1f0] sm:$0xff]
  %v80 = vld [vmem:[%s0 + $0x1f8] sm:$0xff]
  %v81 = vld [vmem:[%s1] sm:$0xff]
  %v82 = vld [vmem:[%s1 + $0x8] sm:$0xff]
  %vm83 = vcmask 130048
  %v85 = vsel %vm83, %v17, 0
  %v88 = vsel %vm83, %v18, 0
  %v91 = vsel %vm83, %v19, 0
  %v94 = vsel %vm83, %v20, 0
  %v97 = vsel %vm83, %v21, 0
  %v100 = vsel %vm83, %v22, 0
  %v103 = vsel %vm83, %v23, 0
  %v106 = vsel %vm83, %v24, 0
  %v109 = vsel %vm83, %v25, 0
  %v112 = vsel %vm83, %v26, 0
  %v115 = vsel %vm83, %v27, 0
  %v118 = vsel %vm83, %v28, 0
  %v121 = vsel %vm83, %v29, 0
  %v124 = vsel %vm83, %v30, 0
  %v127 = vsel %vm83, %v31, 0
  %v130 = vsel %vm83, %v32, 0
  %v133 = vsel %vm83, %v33, 0
  %v136 = vsel %vm83, %v34, 0
  %v139 = vsel %vm83, %v35, 0
  %v142 = vsel %vm83, %v36, 0
  %v145 = vsel %vm83, %v37, 0
  %v148 = vsel %vm83, %v38, 0
  %v151 = vsel %vm83, %v39, 0
  %v154 = vsel %vm83, %v40, 0
  %v157 = vsel %vm83, %v41, 0
  %v160 = vsel %vm83, %v42, 0
  %v163 = vsel %vm83, %v43, 0
  %v166 = vsel %vm83, %v44, 0
  %v169 = vsel %vm83, %v45, 0
  %v172 = vsel %vm83, %v46, 0
  %v175 = vsel %vm83, %v47, 0
  %v178 = vsel %vm83, %v48, 0
  %v181 = vsel %vm83, %v49, 0
  %v184 = vsel %vm83, %v50, 0
  %v187 = vsel %vm83, %v51, 0
  %v190 = vsel %vm83, %v52, 0
  %v193 = vsel %vm83, %v53, 0
  %v196 = vsel %vm83, %v54, 0
  %v199 = vsel %vm83, %v55, 0
  %v202 = vsel %vm83, %v56, 0
  %v205 = vsel %vm83, %v57, 0
  %v208 = vsel %vm83, %v58, 0
  %v211 = vsel %vm83, %v59, 0
  %v214 = vsel %vm83, %v60, 0
  %v217 = vsel %vm83, %v61, 0
  %v220 = vsel %vm83, %v62, 0
  %v223 = vsel %vm83, %v63, 0
  %v226 = vsel %vm83, %v64, 0
  %v229 = vsel %vm83, %v65, 0
  %v232 = vsel %vm83, %v66, 0
  %v235 = vsel %vm83, %v67, 0
  %v238 = vsel %vm83, %v68, 0
  %v241 = vsel %vm83, %v69, 0
  %v244 = vsel %vm83, %v70, 0
  %v247 = vsel %vm83, %v71, 0
  %v250 = vsel %vm83, %v72, 0
  %v253 = vsel %vm83, %v73, 0
  %v256 = vsel %vm83, %v74, 0
  %v259 = vsel %vm83, %v75, 0
  %v262 = vsel %vm83, %v76, 0
  %v265 = vsel %vm83, %v77, 0
  %v268 = vsel %vm83, %v78, 0
  %v271 = vsel %vm83, %v79, 0
  %v274 = vsel %vm83, %v80, 0
  %276 = vmatprep.subr.mxu0 0.0
  %277 = vmatpush1.msra.mxu0 0.0
  %278 = vmatprep.subr.mxu0 0.0
  %279 = vmatpush1.msra.mxu0 0.0
  %280 = vmatprep.subr.mxu0 0.0
  %281 = vmatpush1.msra.mxu0 0.0
  %282 = vmatprep.subr.mxu0 0.0
  %283 = vmatpush1.msra.mxu0 0.0
  %284 = vmatprep.subr.mxu0 0.0
  %285 = vmatpush1.msra.mxu0 0.0
  %286 = vmatprep.subr.mxu0 0.0
  %287 = vmatpush1.msra.mxu0 0.0
  %288 = vmatprep.subr.mxu0 0.0
  %289 = vmatpush1.msra.mxu0 0.0
  %290 = vmatprep.subr.mxu0 0.0
  %291 = vmatpush1.msra.mxu0 0.0
  %292 = vmatprep.subr.mxu0 0.0
  %293 = vmatpush1.msra.mxu0 0.0
  %294 = vmatprep.subr.mxu0 0.0
  %295 = vmatpush1.msra.mxu0 0.0
  %296 = vmatprep.subr.mxu0 0.0
  %297 = vmatpush1.msra.mxu0 0.0
  %298 = vmatprep.subr.mxu0 0.0
  %299 = vmatpush1.msra.mxu0 0.0
  %300 = vmatprep.subr.mxu0 0.0
  %301 = vmatpush1.msra.mxu0 0.0
  %302 = vmatprep.subr.mxu0 0.0
  %303 = vmatpush1.msra.mxu0 0.0
  %304 = vmatprep.subr.mxu0 0.0
  %305 = vmatpush1.msra.mxu0 %v82
  %306 = vmatprep.subr.mxu0 0.0
  %307 = vmatpush1.msra.mxu0 %v81
  %308 = vmatprep.subr.mxu0 0.0
  %309 = vmatpush2.msra.mxu0 0.0
  %310 = vmatprep.subr.mxu0 0.0
  %311 = vmatpush2.msra.mxu0 0.0
  %312 = vmatprep.subr.mxu0 0.0
  %313 = vmatpush2.msra.mxu0 0.0
  %314 = vmatprep.subr.mxu0 0.0
  %315 = vmatpush2.msra.mxu0 0.0
  %316 = vmatprep.subr.mxu0 0.0
  %317 = vmatpush2.msra.mxu0 0.0
  %318 = vmatprep.subr.mxu0 0.0
  %319 = vmatpush2.msra.mxu0 0.0
  %320 = vmatprep.subr.mxu0 0.0
  %321 = vmatpush2.msra.mxu0 0.0
  %322 = vmatprep.subr.mxu0 0.0
  %323 = vmatpush2.msra.mxu0 0.0
  %324 = vmatprep.subr.mxu0 0.0
  %325 = vmatpush2.msra.mxu0 0.0
  %326 = vmatprep.subr.mxu0 0.0
  %327 = vmatpush2.msra.mxu0 0.0
  %328 = vmatprep.subr.mxu0 0.0
  %329 = vmatpush2.msra.mxu0 0.0
  %330 = vmatprep.subr.mxu0 0.0
  %331 = vmatpush2.msra.mxu0 0.0
  %332 = vmatprep.subr.mxu0 0.0
  %333 = vmatpush2.msra.mxu0 0.0
  %334 = vmatprep.subr.mxu0 0.0
  %335 = vmatpush2.msra.mxu0 0.0
  %336 = vmatprep.subr.mxu0 0.0
  %337 = vmatpush2.msra.mxu0 0.0
  %338 = vmatprep.subr.mxu0 0.0
  %339 = vmatpush2.msra.mxu0 0.0
  %340 = vmatprep.mubr.f32.mxu0 0.0
  %341 = vmatmul.mubr.f32.gmra.mxu0 %v85
  %v342 = vpop.f32.mrf.mxu0
  %v343 = vadd.f32 0.0, %v342
  %v344 = vpop.f32.mrf.mxu0
  %345 = vmatprep.mubr.f32.mxu0 0.0
  %346 = vmatmul.mubr.f32.gmra.mxu0 %v88
  %v347 = vpop.f32.mrf.mxu0
  %v348 = vadd.f32 0.0, %v347
  %v349 = vpop.f32.mrf.mxu0
  %350 = vmatprep.mubr.f32.mxu0 0.0
  %351 = vmatmul.mubr.f32.gmra.mxu0 %v91
  %v352 = vpop.f32.mrf.mxu0
  %v353 = vadd.f32 0.0, %v352
  %v354 = vpop.f32.mrf.mxu0
  %355 = vmatprep.mubr.f32.mxu0 0.0
  %356 = vmatmul.mubr.f32.gmra.mxu0 %v94
  %v357 = vpop.f32.mrf.mxu0
  %v358 = vadd.f32 0.0, %v357
  %v359 = vpop.f32.mrf.mxu0
  %360 = vmatprep.mubr.f32.mxu0 0.0
  %361 = vmatmul.mubr.f32.gmra.mxu0 %v97
  %v362 = vpop.f32.mrf.mxu0
  %v363 = vadd.f32 0.0, %v362
  %v364 = vpop.f32.mrf.mxu0
  %365 = vmatprep.mubr.f32.mxu0 0.0
  %366 = vmatmul.mubr.f32.gmra.mxu0 %v100
  %v367 = vpop.f32.mrf.mxu0
  %v368 = vadd.f32 0.0, %v367
  %v369 = vpop.f32.mrf.mxu0
  %370 = vmatprep.mubr.f32.mxu0 0.0
  %371 = vmatmul.mubr.f32.gmra.mxu0 %v103
  %v372 = vpop.f32.mrf.mxu0
  %v373 = vadd.f32 0.0, %v372
  %v374 = vpop.f32.mrf.mxu0
  %375 = vmatprep.mubr.f32.mxu0 0.0
  %376 = vmatmul.mubr.f32.gmra.mxu0 %v106
  %v377 = vpop.f32.mrf.mxu0
  %v378 = vadd.f32 0.0, %v377
  %v379 = vpop.f32.mrf.mxu0
  %380 = vmatprep.mubr.f32.mxu0 0.0
  %381 = vmatmul.mubr.f32.gmra.mxu0 %v109
  %v382 = vpop.f32.mrf.mxu0
  %v383 = vadd.f32 0.0, %v382
  %v384 = vpop.f32.mrf.mxu0
  %385 = vmatprep.mubr.f32.mxu0 0.0
  %386 = vmatmul.mubr.f32.gmra.mxu0 %v112
  %v387 = vpop.f32.mrf.mxu0
  %v388 = vadd.f32 0.0, %v387
  %v389 = vpop.f32.mrf.mxu0
  %390 = vmatprep.mubr.f32.mxu0 0.0
  %391 = vmatmul.mubr.f32.gmra.mxu0 %v115
  %v392 = vpop.f32.mrf.mxu0
  %v393 = vadd.f32 0.0, %v392
  %v394 = vpop.f32.mrf.mxu0
  %395 = vmatprep.mubr.f32.mxu0 0.0
  %396 = vmatmul.mubr.f32.gmra.mxu0 %v118
  %v397 = vpop.f32.mrf.mxu0
  %v398 = vadd.f32 0.0, %v397
  %v399 = vpop.f32.mrf.mxu0
  %400 = vmatprep.mubr.f32.mxu0 0.0
  %401 = vmatmul.mubr.f32.gmra.mxu0 %v121
  %v402 = vpop.f32.mrf.mxu0
  %v403 = vadd.f32 0.0, %v402
  %v404 = vpop.f32.mrf.mxu0
  %405 = vmatprep.mubr.f32.mxu0 0.0
  %406 = vmatmul.mubr.f32.gmra.mxu0 %v124
  %v407 = vpop.f32.mrf.mxu0
  %v408 = vadd.f32 0.0, %v407
  %v409 = vpop.f32.mrf.mxu0
  %410 = vmatprep.mubr.f32.mxu0 0.0
  %411 = vmatmul.mubr.f32.gmra.mxu0 %v127
  %v412 = vpop.f32.mrf.mxu0
  %v413 = vadd.f32 0.0, %v412
  %v414 = vpop.f32.mrf.mxu0
  %415 = vmatprep.mubr.f32.mxu0 0.0
  %416 = vmatmul.mubr.f32.gmra.mxu0 %v130
  %v417 = vpop.f32.mrf.mxu0
  %v418 = vadd.f32 0.0, %v417
  %v419 = vpop.f32.mrf.mxu0
  %420 = vmatprep.mubr.f32.mxu0 0.0
  %421 = vmatmul.mubr.f32.gmra.mxu0 %v133
  %v422 = vpop.f32.mrf.mxu0
  %v423 = vadd.f32 0.0, %v422
  %v424 = vpop.f32.mrf.mxu0
  %425 = vmatprep.mubr.f32.mxu0 0.0
  %426 = vmatmul.mubr.f32.gmra.mxu0 %v136
  %v427 = vpop.f32.mrf.mxu0
  %v428 = vadd.f32 0.0, %v427
  %v429 = vpop.f32.mrf.mxu0
  %430 = vmatprep.mubr.f32.mxu0 0.0
  %431 = vmatmul.mubr.f32.gmra.mxu0 %v139
  %v432 = vpop.f32.mrf.mxu0
  %v433 = vadd.f32 0.0, %v432
  %v434 = vpop.f32.mrf.mxu0
  %435 = vmatprep.mubr.f32.mxu0 0.0
  %436 = vmatmul.mubr.f32.gmra.mxu0 %v142
  %v437 = vpop.f32.mrf.mxu0
  %v438 = vadd.f32 0.0, %v437
  %v439 = vpop.f32.mrf.mxu0
  %440 = vmatprep.mubr.f32.mxu0 0.0
  %441 = vmatmul.mubr.f32.gmra.mxu0 %v145
  %v442 = vpop.f32.mrf.mxu0
  %v443 = vadd.f32 0.0, %v442
  %v444 = vpop.f32.mrf.mxu0
  %445 = vmatprep.mubr.f32.mxu0 0.0
  %446 = vmatmul.mubr.f32.gmra.mxu0 %v148
  %v447 = vpop.f32.mrf.mxu0
  %v448 = vadd.f32 0.0, %v447
  %v449 = vpop.f32.mrf.mxu0
  %450 = vmatprep.mubr.f32.mxu0 0.0
  %451 = vmatmul.mubr.f32.gmra.mxu0 %v151
  %v452 = vpop.f32.mrf.mxu0
  %v453 = vadd.f32 0.0, %v452
  %v454 = vpop.f32.mrf.mxu0
  %455 = vmatprep.mubr.f32.mxu0 0.0
  %456 = vmatmul.mubr.f32.gmra.mxu0 %v154
  %v457 = vpop.f32.mrf.mxu0
  %v458 = vadd.f32 0.0, %v457
  %v459 = vpop.f32.mrf.mxu0
  %460 = vmatprep.mubr.f32.mxu0 0.0
  %461 = vmatmul.mubr.f32.gmra.mxu0 %v157
  %v462 = vpop.f32.mrf.mxu0
  %v463 = vadd.f32 0.0, %v462
  %v464 = vpop.f32.mrf.mxu0
  %465 = vmatprep.mubr.f32.mxu0 0.0
  %466 = vmatmul.mubr.f32.gmra.mxu0 %v160
  %v467 = vpop.f32.mrf.mxu0
  %v468 = vadd.f32 0.0, %v467
  %v469 = vpop.f32.mrf.mxu0
  %470 = vmatprep.mubr.f32.mxu0 0.0
  %471 = vmatmul.mubr.f32.gmra.mxu0 %v163
  %v472 = vpop.f32.mrf.mxu0
  %v473 = vadd.f32 0.0, %v472
  %v474 = vpop.f32.mrf.mxu0
  %475 = vmatprep.mubr.f32.mxu0 0.0
  %476 = vmatmul.mubr.f32.gmra.mxu0 %v166
  %v477 = vpop.f32.mrf.mxu0
  %v478 = vadd.f32 0.0, %v477
  %v479 = vpop.f32.mrf.mxu0
  %480 = vmatprep.mubr.f32.mxu0 0.0
  %481 = vmatmul.mubr.f32.gmra.mxu0 %v169
  %v482 = vpop.f32.mrf.mxu0
  %v483 = vadd.f32 0.0, %v482
  %v484 = vpop.f32.mrf.mxu0
  %485 = vmatprep.mubr.f32.mxu0 0.0
  %486 = vmatmul.mubr.f32.gmra.mxu0 %v172
  %v487 = vpop.f32.mrf.mxu0
  %v488 = vadd.f32 0.0, %v487
  %v489 = vpop.f32.mrf.mxu0
  %490 = vmatprep.mubr.f32.mxu0 0.0
  %491 = vmatmul.mubr.f32.gmra.mxu0 %v175
  %v492 = vpop.f32.mrf.mxu0
  %v493 = vadd.f32 0.0, %v492
  %v494 = vpop.f32.mrf.mxu0
  %495 = vmatprep.mubr.f32.mxu0 0.0
  %496 = vmatmul.mubr.f32.gmra.mxu0 %v178
  %v497 = vpop.f32.mrf.mxu0
  %v498 = vadd.f32 0.0, %v497
  %v499 = vpop.f32.mrf.mxu0
  %500 = vmatprep.mubr.f32.mxu0 0.0
  %501 = vmatmul.mubr.f32.gmra.mxu0 %v181
  %v502 = vpop.f32.mrf.mxu0
  %v503 = vadd.f32 0.0, %v502
  %v504 = vpop.f32.mrf.mxu0
  %505 = vmatprep.mubr.f32.mxu0 0.0
  %506 = vmatmul.mubr.f32.gmra.mxu0 %v184
  %v507 = vpop.f32.mrf.mxu0
  %v508 = vadd.f32 0.0, %v507
  %v509 = vpop.f32.mrf.mxu0
  %510 = vmatprep.mubr.f32.mxu0 0.0
  %511 = vmatmul.mubr.f32.gmra.mxu0 %v187
  %v512 = vpop.f32.mrf.mxu0
  %v513 = vadd.f32 0.0, %v512
  %v514 = vpop.f32.mrf.mxu0
  %515 = vmatprep.mubr.f32.mxu0 0.0
  %516 = vmatmul.mubr.f32.gmra.mxu0 %v190
  %v517 = vpop.f32.mrf.mxu0
  %v518 = vadd.f32 0.0, %v517
  %v519 = vpop.f32.mrf.mxu0
  %520 = vmatprep.mubr.f32.mxu0 0.0
  %521 = vmatmul.mubr.f32.gmra.mxu0 %v193
  %v522 = vpop.f32.mrf.mxu0
  %v523 = vadd.f32 0.0, %v522
  %v524 = vpop.f32.mrf.mxu0
  %525 = vmatprep.mubr.f32.mxu0 0.0
  %526 = vmatmul.mubr.f32.gmra.mxu0 %v196
  %v527 = vpop.f32.mrf.mxu0
  %v528 = vadd.f32 0.0, %v527
  %v529 = vpop.f32.mrf.mxu0
  %530 = vmatprep.mubr.f32.mxu0 0.0
  %531 = vmatmul.mubr.f32.gmra.mxu0 %v199
  %v532 = vpop.f32.mrf.mxu0
  %v533 = vadd.f32 0.0, %v532
  %v534 = vpop.f32.mrf.mxu0
  %535 = vmatprep.mubr.f32.mxu0 0.0
  %536 = vmatmul.mubr.f32.gmra.mxu0 %v202
  %v537 = vpop.f32.mrf.mxu0
  %v538 = vadd.f32 0.0, %v537
  %v539 = vpop.f32.mrf.mxu0
  %540 = vmatprep.mubr.f32.mxu0 0.0
  %541 = vmatmul.mubr.f32.gmra.mxu0 %v205
  %v542 = vpop.f32.mrf.mxu0
  %v543 = vadd.f32 0.0, %v542
  %v544 = vpop.f32.mrf.mxu0
  %545 = vmatprep.mubr.f32.mxu0 0.0
  %546 = vmatmul.mubr.f32.gmra.mxu0 %v208
  %v547 = vpop.f32.mrf.mxu0
  %v548 = vadd.f32 0.0, %v547
  %v549 = vpop.f32.mrf.mxu0
  %550 = vmatprep.mubr.f32.mxu0 0.0
  %551 = vmatmul.mubr.f32.gmra.mxu0 %v211
  %v552 = vpop.f32.mrf.mxu0
  %v553 = vadd.f32 0.0, %v552
  %v554 = vpop.f32.mrf.mxu0
  %555 = vmatprep.mubr.f32.mxu0 0.0
  %556 = vmatmul.mubr.f32.gmra.mxu0 %v214
  %v557 = vpop.f32.mrf.mxu0
  %v558 = vadd.f32 0.0, %v557
  %v559 = vpop.f32.mrf.mxu0
  %560 = vmatprep.mubr.f32.mxu0 0.0
  %561 = vmatmul.mubr.f32.gmra.mxu0 %v217
  %v562 = vpop.f32.mrf.mxu0
  %v563 = vadd.f32 0.0, %v562
  %v564 = vpop.f32.mrf.mxu0
  %565 = vmatprep.mubr.f32.mxu0 0.0
  %566 = vmatmul.mubr.f32.gmra.mxu0 %v220
  %v567 = vpop.f32.mrf.mxu0
  %v568 = vadd.f32 0.0, %v567
  %v569 = vpop.f32.mrf.mxu0
  %570 = vmatprep.mubr.f32.mxu0 0.0
  %571 = vmatmul.mubr.f32.gmra.mxu0 %v223
  %v572 = vpop.f32.mrf.mxu0
  %v573 = vadd.f32 0.0, %v572
  %v574 = vpop.f32.mrf.mxu0
  %575 = vmatprep.mubr.f32.mxu0 0.0
  %576 = vmatmul.mubr.f32.gmra.mxu0 %v226
  %v577 = vpop.f32.mrf.mxu0
  %v578 = vadd.f32 0.0, %v577
  %v579 = vpop.f32.mrf.mxu0
  %580 = vmatprep.mubr.f32.mxu0 0.0
  %581 = vmatmul.mubr.f32.gmra.mxu0 %v229
  %v582 = vpop.f32.mrf.mxu0
  %v583 = vadd.f32 0.0, %v582
  %v584 = vpop.f32.mrf.mxu0
  %585 = vmatprep.mubr.f32.mxu0 0.0
  %586 = vmatmul.mubr.f32.gmra.mxu0 %v232
  %v587 = vpop.f32.mrf.mxu0
  %v588 = vadd.f32 0.0, %v587
  %v589 = vpop.f32.mrf.mxu0
  %590 = vmatprep.mubr.f32.mxu0 0.0
  %591 = vmatmul.mubr.f32.gmra.mxu0 %v235
  %v592 = vpop.f32.mrf.mxu0
  %v593 = vadd.f32 0.0, %v592
  %v594 = vpop.f32.mrf.mxu0
  %595 = vmatprep.mubr.f32.mxu0 0.0
  %596 = vmatmul.mubr.f32.gmra.mxu0 %v238
  %v597 = vpop.f32.mrf.mxu0
  %v598 = vadd.f32 0.0, %v597
  %v599 = vpop.f32.mrf.mxu0
  %600 = vmatprep.mubr.f32.mxu0 0.0
  %601 = vmatmul.mubr.f32.gmra.mxu0 %v241
  %v602 = vpop.f32.mrf.mxu0
  %v603 = vadd.f32 0.0, %v602
  %v604 = vpop.f32.mrf.mxu0
  %605 = vmatprep.mubr.f32.mxu0 0.0
  %606 = vmatmul.mubr.f32.gmra.mxu0 %v244
  %v607 = vpop.f32.mrf.mxu0
  %v608 = vadd.f32 0.0, %v607
  %v609 = vpop.f32.mrf.mxu0
  %610 = vmatprep.mubr.f32.mxu0 0.0
  %611 = vmatmul.mubr.f32.gmra.mxu0 %v247
  %v612 = vpop.f32.mrf.mxu0
  %v613 = vadd.f32 0.0, %v612
  %v614 = vpop.f32.mrf.mxu0
  %615 = vmatprep.mubr.f32.mxu0 0.0
  %616 = vmatmul.mubr.f32.gmra.mxu0 %v250
  %v617 = vpop.f32.mrf.mxu0
  %v618 = vadd.f32 0.0, %v617
  %v619 = vpop.f32.mrf.mxu0
  %620 = vmatprep.mubr.f32.mxu0 0.0
  %621 = vmatmul.mubr.f32.gmra.mxu0 %v253
  %v622 = vpop.f32.mrf.mxu0
  %v623 = vadd.f32 0.0, %v622
  %v624 = vpop.f32.mrf.mxu0
  %625 = vmatprep.mubr.f32.mxu0 0.0
  %626 = vmatmul.mubr.f32.gmra.mxu0 %v256
  %v627 = vpop.f32.mrf.mxu0
  %v628 = vadd.f32 0.0, %v627
  %v629 = vpop.f32.mrf.mxu0
  %630 = vmatprep.mubr.f32.mxu0 0.0
  %631 = vmatmul.mubr.f32.gmra.mxu0 %v259
  %v632 = vpop.f32.mrf.mxu0
  %v633 = vadd.f32 0.0, %v632
  %v634 = vpop.f32.mrf.mxu0
  %635 = vmatprep.mubr.f32.mxu0 0.0
  %636 = vmatmul.mubr.f32.gmra.mxu0 %v262
  %v637 = vpop.f32.mrf.mxu0
  %v638 = vadd.f32 0.0, %v637
  %v639 = vpop.f32.mrf.mxu0
  %640 = vmatprep.mubr.f32.mxu0 0.0
  %641 = vmatmul.mubr.f32.gmra.mxu0 %v265
  %v642 = vpop.f32.mrf.mxu0
  %v643 = vadd.f32 0.0, %v642
  %v644 = vpop.f32.mrf.mxu0
  %645 = vmatprep.mubr.f32.mxu0 0.0
  %646 = vmatmul.mubr.f32.gmra.mxu0 %v268
  %v647 = vpop.f32.mrf.mxu0
  %v648 = vadd.f32 0.0, %v647
  %v649 = vpop.f32.mrf.mxu0
  %650 = vmatprep.mubr.f32.mxu0 0.0
  %651 = vmatmul.mubr.f32.gmra.mxu0 %v271
  %v652 = vpop.f32.mrf.mxu0
  %v653 = vadd.f32 0.0, %v652
  %v654 = vpop.f32.mrf.mxu0
  %655 = vmatprep.mubr.f32.mxu0 0.0
  %656 = vmatmul.mubr.f32.gmra.mxu0 %v274
  %v657 = vpop.f32.mrf.mxu0
  %v658 = vadd.f32 0.0, %v657
  %v659 = vpop.f32.mrf.mxu0
  %660 = vdwg.mxu0
  %v661 = vld [vmem:[%s2] sm:$0x1]
  %v663 = vlaneseq
  %v664 = vshrl.u32 %v663, 7
  %v665 = vsub.s32 0, %v664
  %v666 = vrot.slane %v661, %v665
  %v668 = vmul.f32 %v343, %v666
  %v669 = vmul.f32 %v348, %v666
  %v670 = vmul.f32 %v353, %v666
  %v671 = vmul.f32 %v358, %v666
  %v672 = vmul.f32 %v363, %v666
  %v673 = vmul.f32 %v368, %v666
  %v674 = vmul.f32 %v373, %v666
  %v675 = vmul.f32 %v378, %v666
  %v676 = vmul.f32 %v383, %v666
  %v677 = vmul.f32 %v388, %v666
  %v678 = vmul.f32 %v393, %v666
  %v679 = vmul.f32 %v398, %v666
  %v680 = vmul.f32 %v403, %v666
  %v681 = vmul.f32 %v408, %v666
  %v682 = vmul.f32 %v413, %v666
  %v683 = vmul.f32 %v418, %v666
  %v684 = vmul.f32 %v423, %v666
  %v685 = vmul.f32 %v428, %v666
  %v686 = vmul.f32 %v433, %v666
  %v687 = vmul.f32 %v438, %v666
  %v688 = vmul.f32 %v443, %v666
  %v689 = vmul.f32 %v448, %v666
  %v690 = vmul.f32 %v453, %v666
  %v691 = vmul.f32 %v458, %v666
  %v692 = vmul.f32 %v463, %v666
  %v693 = vmul.f32 %v468, %v666
  %v694 = vmul.f32 %v473, %v666
  %v695 = vmul.f32 %v478, %v666
  %v696 = vmul.f32 %v483, %v666
  %v697 = vmul.f32 %v488, %v666
  %v698 = vmul.f32 %v493, %v666
  %v699 = vmul.f32 %v498, %v666
  %v700 = vmul.f32 %v503, %v666
  %v701 = vmul.f32 %v508, %v666
  %v702 = vmul.f32 %v513, %v666
  %v703 = vmul.f32 %v518, %v666
  %v704 = vmul.f32 %v523, %v666
  %v705 = vmul.f32 %v528, %v666
  %v706 = vmul.f32 %v533, %v666
  %v707 = vmul.f32 %v538, %v666
  %v708 = vmul.f32 %v543, %v666
  %v709 = vmul.f32 %v548, %v666
  %v710 = vmul.f32 %v553, %v666
  %v711 = vmul.f32 %v558, %v666
  %v712 = vmul.f32 %v563, %v666
  %v713 = vmul.f32 %v568, %v666
  %v714 = vmul.f32 %v573, %v666
  %v715 = vmul.f32 %v578, %v666
  %v716 = vmul.f32 %v583, %v666
  %v717 = vmul.f32 %v588, %v666
  %v718 = vmul.f32 %v593, %v666
  %v719 = vmul.f32 %v598, %v666
  %v720 = vmul.f32 %v603, %v666
  %v721 = vmul.f32 %v608, %v666
  %v722 = vmul.f32 %v613, %v666
  %v723 = vmul.f32 %v618, %v666
  %v724 = vmul.f32 %v623, %v666
  %v725 = vmul.f32 %v628, %v666
  %v726 = vmul.f32 %v633, %v666
  %v727 = vmul.f32 %v638, %v666
  %v728 = vmul.f32 %v643, %v666
  %v729 = vmul.f32 %v648, %v666
  %v730 = vmul.f32 %v653, %v666
  %v731 = vmul.f32 %v658, %v666
  %v732 = vld [vmem:[%s3] sm:$0x1]
  %v734 = vlaneseq
  %v735 = vshrl.u32 %v734, 7
  %v736 = vsub.s32 0, %v735
  %v737 = vrot.slane %v732, %v736
  %v739 = vadd.f32 %v668, %v737
  %v740 = vadd.f32 %v669, %v737
  %v741 = vadd.f32 %v670, %v737
  %v742 = vadd.f32 %v671, %v737
  %v743 = vadd.f32 %v672, %v737
  %v744 = vadd.f32 %v673, %v737
  %v745 = vadd.f32 %v674, %v737
  %v746 = vadd.f32 %v675, %v737
  %v747 = vadd.f32 %v676, %v737
  %v748 = vadd.f32 %v677, %v737
  %v749 = vadd.f32 %v678, %v737
  %v750 = vadd.f32 %v679, %v737
  %v751 = vadd.f32 %v680, %v737
  %v752 = vadd.f32 %v681, %v737
  %v753 = vadd.f32 %v682, %v737
  %v754 = vadd.f32 %v683, %v737
  %v755 = vadd.f32 %v684, %v737
  %v756 = vadd.f32 %v685, %v737
  %v757 = vadd.f32 %v686, %v737
  %v758 = vadd.f32 %v687, %v737
  %v759 = vadd.f32 %v688, %v737
  %v760 = vadd.f32 %v689, %v737
  %v761 = vadd.f32 %v690, %v737
  %v762 = vadd.f32 %v691, %v737
  %v763 = vadd.f32 %v692, %v737
  %v764 = vadd.f32 %v693, %v737
  %v765 = vadd.f32 %v694, %v737
  %v766 = vadd.f32 %v695, %v737
  %v767 = vadd.f32 %v696, %v737
  %v768 = vadd.f32 %v697, %v737
  %v769 = vadd.f32 %v698, %v737
  %v770 = vadd.f32 %v699, %v737
  %v771 = vadd.f32 %v700, %v737
  %v772 = vadd.f32 %v701, %v737
  %v773 = vadd.f32 %v702, %v737
  %v774 = vadd.f32 %v703, %v737
  %v775 = vadd.f32 %v704, %v737
  %v776 = vadd.f32 %v705, %v737
  %v777 = vadd.f32 %v706, %v737
  %v778 = vadd.f32 %v707, %v737
  %v779 = vadd.f32 %v708, %v737
  %v780 = vadd.f32 %v709, %v737
  %v781 = vadd.f32 %v710, %v737
  %v782 = vadd.f32 %v711, %v737
  %v783 = vadd.f32 %v712, %v737
  %v784 = vadd.f32 %v713, %v737
  %v785 = vadd.f32 %v714, %v737
  %v786 = vadd.f32 %v715, %v737
  %v787 = vadd.f32 %v716, %v737
  %v788 = vadd.f32 %v717, %v737
  %v789 = vadd.f32 %v718, %v737
  %v790 = vadd.f32 %v719, %v737
  %v791 = vadd.f32 %v720, %v737
  %v792 = vadd.f32 %v721, %v737
  %v793 = vadd.f32 %v722, %v737
  %v794 = vadd.f32 %v723, %v737
  %v795 = vadd.f32 %v724, %v737
  %v796 = vadd.f32 %v725, %v737
  %v797 = vadd.f32 %v726, %v737
  %v798 = vadd.f32 %v727, %v737
  %v799 = vadd.f32 %v728, %v737
  %v800 = vadd.f32 %v729, %v737
  %v801 = vadd.f32 %v730, %v737
  %v802 = vadd.f32 %v731, %v737
  %v803 = vmax.f32 %v739, 0.0
  %v804 = vmax.f32 %v740, 0.0
  %v805 = vmax.f32 %v741, 0.0
  %v806 = vmax.f32 %v742, 0.0
  %v807 = vmax.f32 %v743, 0.0
  %v808 = vmax.f32 %v744, 0.0
  %v809 = vmax.f32 %v745, 0.0
  %v810 = vmax.f32 %v746, 0.0
  %v811 = vmax.f32 %v747, 0.0
  %v812 = vmax.f32 %v748, 0.0
  %v813 = vmax.f32 %v749, 0.0
  %v814 = vmax.f32 %v750, 0.0
  %v815 = vmax.f32 %v751, 0.0
  %v816 = vmax.f32 %v752, 0.0
  %v817 = vmax.f32 %v753, 0.0
  %v818 = vmax.f32 %v754, 0.0
  %v819 = vmax.f32 %v755, 0.0
  %v820 = vmax.f32 %v756, 0.0
  %v821 = vmax.f32 %v757, 0.0
  %v822 = vmax.f32 %v758, 0.0
  %v823 = vmax.f32 %v759, 0.0
  %v824 = vmax.f32 %v760, 0.0
  %v825 = vmax.f32 %v761, 0.0
  %v826 = vmax.f32 %v762, 0.0
  %v827 = vmax.f32 %v763, 0.0
  %v828 = vmax.f32 %v764, 0.0
  %v829 = vmax.f32 %v765, 0.0
  %v830 = vmax.f32 %v766, 0.0
  %v831 = vmax.f32 %v767, 0.0
  %v832 = vmax.f32 %v768, 0.0
  %v833 = vmax.f32 %v769, 0.0
  %v834 = vmax.f32 %v770, 0.0
  %v835 = vmax.f32 %v771, 0.0
  %v836 = vmax.f32 %v772, 0.0
  %v837 = vmax.f32 %v773, 0.0
  %v838 = vmax.f32 %v774, 0.0
  %v839 = vmax.f32 %v775, 0.0
  %v840 = vmax.f32 %v776, 0.0
  %v841 = vmax.f32 %v777, 0.0
  %v842 = vmax.f32 %v778, 0.0
  %v843 = vmax.f32 %v779, 0.0
  %v844 = vmax.f32 %v780, 0.0
  %v845 = vmax.f32 %v781, 0.0
  %v846 = vmax.f32 %v782, 0.0
  %v847 = vmax.f32 %v783, 0.0
  %v848 = vmax.f32 %v784, 0.0
  %v849 = vmax.f32 %v785, 0.0
  %v850 = vmax.f32 %v786, 0.0
  %v851 = vmax.f32 %v787, 0.0
  %v852 = vmax.f32 %v788, 0.0
  %v853 = vmax.f32 %v789, 0.0
  %v854 = vmax.f32 %v790, 0.0
  %v855 = vmax.f32 %v791, 0.0
  %v856 = vmax.f32 %v792, 0.0
  %v857 = vmax.f32 %v793, 0.0
  %v858 = vmax.f32 %v794, 0.0
  %v859 = vmax.f32 %v795, 0.0
  %v860 = vmax.f32 %v796, 0.0
  %v861 = vmax.f32 %v797, 0.0
  %v862 = vmax.f32 %v798, 0.0
  %v863 = vmax.f32 %v799, 0.0
  %v864 = vmax.f32 %v800, 0.0
  %v865 = vmax.f32 %v801, 0.0
  %v866 = vmax.f32 %v802, 0.0
  %vm867 = vcmask 162816
  %868 = vst.msk [vmem:[%s4] sm:$0xff] %vm867, %v803
  %869 = vst.msk [vmem:[%s4 + $0x8] sm:$0xff] %vm867, %v804
  %870 = vst.msk [vmem:[%s4 + $0x10] sm:$0xff] %vm867, %v805
  %871 = vst.msk [vmem:[%s4 + $0x18] sm:$0xff] %vm867, %v806
  %872 = vst.msk [vmem:[%s4 + $0x20] sm:$0xff] %vm867, %v807
  %873 = vst.msk [vmem:[%s4 + $0x28] sm:$0xff] %vm867, %v808
  %874 = vst.msk [vmem:[%s4 + $0x30] sm:$0xff] %vm867, %v809
  %875 = vst.msk [vmem:[%s4 + $0x38] sm:$0xff] %vm867, %v810
  %876 = vst.msk [vmem:[%s4 + $0x40] sm:$0xff] %vm867, %v811
  %877 = vst.msk [vmem:[%s4 + $0x48] sm:$0xff] %vm867, %v812
  %878 = vst.msk [vmem:[%s4 + $0x50] sm:$0xff] %vm867, %v813
  %879 = vst.msk [vmem:[%s4 + $0x58] sm:$0xff] %vm867, %v814
  %880 = vst.msk [vmem:[%s4 + $0x60] sm:$0xff] %vm867, %v815
  %881 = vst.msk [vmem:[%s4 + $0x68] sm:$0xff] %vm867, %v816
  %882 = vst.msk [vmem:[%s4 + $0x70] sm:$0xff] %vm867, %v817
  %883 = vst.msk [vmem:[%s4 + $0x78] sm:$0xff] %vm867, %v818
  %884 = vst.msk [vmem:[%s4 + $0x80] sm:$0xff] %vm867, %v819
  %885 = vst.msk [vmem:[%s4 + $0x88] sm:$0xff] %vm867, %v820
  %886 = vst.msk [vmem:[%s4 + $0x90] sm:$0xff] %vm867, %v821
  %887 = vst.msk [vmem:[%s4 + $0x98] sm:$0xff] %vm867, %v822
  %888 = vst.msk [vmem:[%s4 + $0xa0] sm:$0xff] %vm867, %v823
  %889 = vst.msk [vmem:[%s4 + $0xa8] sm:$0xff] %vm867, %v824
  %890 = vst.msk [vmem:[%s4 + $0xb0] sm:$0xff] %vm867, %v825
  %891 = vst.msk [vmem:[%s4 + $0xb8] sm:$0xff] %vm867, %v826
  %892 = vst.msk [vmem:[%s4 + $0xc0] sm:$0xff] %vm867, %v827
  %893 = vst.msk [vmem:[%s4 + $0xc8] sm:$0xff] %vm867, %v828
  %894 = vst.msk [vmem:[%s4 + $0xd0] sm:$0xff] %vm867, %v829
  %895 = vst.msk [vmem:[%s4 + $0xd8] sm:$0xff] %vm867, %v830
  %896 = vst.msk [vmem:[%s4 + $0xe0] sm:$0xff] %vm867, %v831
  %897 = vst.msk [vmem:[%s4 + $0xe8] sm:$0xff] %vm867, %v832
  %898 = vst.msk [vmem:[%s4 + $0xf0] sm:$0xff] %vm867, %v833
  %899 = vst.msk [vmem:[%s4 + $0xf8] sm:$0xff] %vm867, %v834
  %900 = vst.msk [vmem:[%s4 + $0x100] sm:$0xff] %vm867, %v835
  %901 = vst.msk [vmem:[%s4 + $0x108] sm:$0xff] %vm867, %v836
  %902 = vst.msk [vmem:[%s4 + $0x110] sm:$0xff] %vm867, %v837
  %903 = vst.msk [vmem:[%s4 + $0x118] sm:$0xff] %vm867, %v838
  %904 = vst.msk [vmem:[%s4 + $0x120] sm:$0xff] %vm867, %v839
  %905 = vst.msk [vmem:[%s4 + $0x128] sm:$0xff] %vm867, %v840
  %906 = vst.msk [vmem:[%s4 + $0x130] sm:$0xff] %vm867, %v841
  %907 = vst.msk [vmem:[%s4 + $0x138] sm:$0xff] %vm867, %v842
  %908 = vst.msk [vmem:[%s4 + $0x140] sm:$0xff] %vm867, %v843
  %909 = vst.msk [vmem:[%s4 + $0x148] sm:$0xff] %vm867, %v844
  %910 = vst.msk [vmem:[%s4 + $0x150] sm:$0xff] %vm867, %v845
  %911 = vst.msk [vmem:[%s4 + $0x158] sm:$0xff] %vm867, %v846
  %912 = vst.msk [vmem:[%s4 + $0x160] sm:$0xff] %vm867, %v847
  %913 = vst.msk [vmem:[%s4 + $0x168] sm:$0xff] %vm867, %v848
  %914 = vst.msk [vmem:[%s4 + $0x170] sm:$0xff] %vm867, %v849
  %915 = vst.msk [vmem:[%s4 + $0x178] sm:$0xff] %vm867, %v850
  %916 = vst.msk [vmem:[%s4 + $0x180] sm:$0xff] %vm867, %v851
  %917 = vst.msk [vmem:[%s4 + $0x188] sm:$0xff] %vm867, %v852
  %918 = vst.msk [vmem:[%s4 + $0x190] sm:$0xff] %vm867, %v853
  %919 = vst.msk [vmem:[%s4 + $0x198] sm:$0xff] %vm867, %v854
  %920 = vst.msk [vmem:[%s4 + $0x1a0] sm:$0xff] %vm867, %v855
  %921 = vst.msk [vmem:[%s4 + $0x1a8] sm:$0xff] %vm867, %v856
  %922 = vst.msk [vmem:[%s4 + $0x1b0] sm:$0xff] %vm867, %v857
  %923 = vst.msk [vmem:[%s4 + $0x1b8] sm:$0xff] %vm867, %v858
  %924 = vst.msk [vmem:[%s4 + $0x1c0] sm:$0xff] %vm867, %v859
  %925 = vst.msk [vmem:[%s4 + $0x1c8] sm:$0xff] %vm867, %v860
  %926 = vst.msk [vmem:[%s4 + $0x1d0] sm:$0xff] %vm867, %v861
  %927 = vst.msk [vmem:[%s4 + $0x1d8] sm:$0xff] %vm867, %v862
  %928 = vst.msk [vmem:[%s4 + $0x1e0] sm:$0xff] %vm867, %v863
  %929 = vst.msk [vmem:[%s4 + $0x1e8] sm:$0xff] %vm867, %v864
  %930 = vst.msk [vmem:[%s4 + $0x1f0] sm:$0xff] %vm867, %v865
  %931 = vst.msk [vmem:[%s4 + $0x1f8] sm:$0xff] %vm867, %v866
  // Predicated region
  $region18: #{tpu_custom_call.1} parent=0 // pred_check
    _
  $region19: #{tpu_custom_call.1} parent=0 // pred_check_branch
    %933 = sbr.rel (0) target = $region21
  $region20: #{tpu_custom_call.1} parent=0 // pred_region
    _
  $region21: #{tpu_custom_call.1} parent=0 // pred_fallthru
    _
  // Predicated region
  $region22: #{tpu_custom_call.1} parent=0 // pred_check
    _
  $region23: #{tpu_custom_call.1} parent=0 // pred_check_branch
    %935 = sbr.rel (0) target = $region25
  $region24: #{tpu_custom_call.1} parent=0 // pred_region
    _
  $region25: #{tpu_custom_call.1} parent=0 // pred_fallthru
    _

</llo_original>
